<compile_context>
chip_gen: v7x
topology: tpu7x:2x2x1
jax: 0.10.0
libtpu: 0.0.40
codegen_flags: <defaults>
</compile_context>

<pallas_src>
import functools

import jax
import jax.numpy as jnp
from jax import lax
from jax.experimental import pallas as pl
from jax.experimental.pallas import tpu as pltpu


def basic_block_kernel(x_ref, w1_ref, b1_ref, w2_ref, b2_ref, mask_ref,
                       out_ref, xpad_ref, hpad_ref, col_ref, *,
                       H, W, cin, cout):
    Wp = W + 2                    # padded row width
    L = H * Wp                    # flat "L1" length (valid rows, padded width)
    inner = Wp + 1                # flat offset where the padded interior starts
    tail = (H + 1) * Wp + 1       # first position never touched by the interior store
    padlen = xpad_ref.shape[1]

    # --- keep the 1-pixel zero border of the padded scratches valid --------
    # Only the top border row and the bottom border tail are never overwritten
    # below, so only those tiny lane ranges are cleared every step (no full
    # scratch memset).  Side-border columns are rewritten with zeros each step
    # by the padded input / masked activation stores.
    xpad_ref[:, 0:inner] = jnp.zeros((cin, inner), jnp.bfloat16)
    xpad_ref[:, tail:] = jnp.zeros((cin, padlen - tail), jnp.bfloat16)
    hpad_ref[:, 0:inner] = jnp.zeros((cout, inner), jnp.bfloat16)
    hpad_ref[:, tail:] = jnp.zeros((cout, padlen - tail), jnp.bfloat16)

    # --- write the (already W-padded, flattened) bf16 input interior -------
    x_l1 = x_ref[0]                                  # (cin, L) bf16
    xpad_ref[:, inner:inner + L] = x_l1              # one contiguous store

    mask = mask_ref[...]                             # (1, L) f32, 0 on pad cols

    def conv(pad_ref, w_ref, c):
        # im2col: 9 constant flat-offset tap slices stacked along K.
        for dy in range(3):
            for dx in range(3):
                k = dy * 3 + dx
                off = dy * Wp + dx
                col_ref[k * c:(k + 1) * c, :] = pad_ref[:, off:off + L]
        # One fat MXU matmul per conv: (cout, 9*c) x (9*c, L), f32 accumulation.
        return jnp.dot(w_ref[...], col_ref[...],
                       preferred_element_type=jnp.float32)    # (cout, L) f32

    # --- conv1 (BN1 scale folded into weights) + bias + ReLU ---------------
    acc1 = conv(xpad_ref, w1_ref, cin)
    h = jnp.maximum(acc1 + b1_ref[...], 0.0) * mask           # zero pad columns
    # Intermediate stays on-chip: one contiguous bf16 store into the padded scratch.
    hpad_ref[:, inner:inner + L] = h.astype(jnp.bfloat16)

    # --- conv2 (BN2 scale folded) + bias + residual add + ReLU -------------
    acc2 = conv(hpad_ref, w2_ref, cout)
    out = jnp.maximum(acc2 + b2_ref[...] + x_l1.astype(jnp.float32), 0.0)
    out_ref[0] = out.astype(out_ref.dtype)                    # lane-dense store


def _fold_bn(gamma, beta, mean, var, eps=1e-5):
    scale = gamma / jnp.sqrt(var + eps)
    bias = beta - mean * scale
    return scale.astype(jnp.float32), bias.astype(jnp.float32)


def basic_block_forward(x_nchw, params):
    """Pallas implementation of BasicBlock.forward (stride=1, downsample=None)."""
    w1, bn1, w2, bn2 = params["w1"], params["bn1"], params["w2"], params["bn2"]
    cout, cin = w1.shape[0], w1.shape[1]
    assert cin == cout, "stride=1 / no-downsample BasicBlock requires cin == cout"

    N, C, H, W = x_nchw.shape
    assert C == cin
    Wp = W + 2
    L = H * Wp
    padlen = (H + 3) * Wp          # >= (H+2)*Wp + 2 : room for the deepest tap slice

    s1, b1 = _fold_bn(*bn1)
    s2, b2 = _fold_bn(*bn2)

    def taps2d(w, s):
        # PyTorch (Cout, Cin, 3, 3) -> (Cout, 3, 3, Cin) -> (Cout, 9*Cin),
        # BN scale folded in, bf16 for the MXU.  K order matches the im2col.
        t = jnp.transpose(w.astype(jnp.float32), (0, 2, 3, 1)).reshape(w.shape[0], -1)
        return (t * s[:, None]).astype(jnp.bfloat16)

    w1_2d = taps2d(w1, s1)
    w2_2d = taps2d(w2, s2)
    b1c = b1.reshape(cout, 1)
    b2c = b2.reshape(cout, 1)

    # Activations cross HBM as bf16.  Zero-pad only W (by 2) and flatten
    # (H, W+2) so spatial pixels sit on the lane axis (lane-dense) and every
    # 3x3 tap becomes a constant flat offset inside the kernel.
    x_l1 = jnp.pad(x_nchw.astype(jnp.bfloat16),
                   ((0, 0), (0, 0), (0, 0), (0, 2))).reshape(N, C, L)

    # 1.0 on real pixels, 0.0 on the two pad columns of every row.
    col_mask = (jnp.arange(L, dtype=jnp.int32) % Wp < W).astype(jnp.float32)
    col_mask = col_mask.reshape(1, L)

    kernel = functools.partial(basic_block_kernel, H=H, W=W, cin=cin, cout=cout)

    flops = 2 * 2 * 9 * cin * cout * L * N           # both convs, MACs*2
    bytes_accessed = (x_l1.size * 2 + N * cout * L * 2
                      + (w1_2d.size + w2_2d.size) * 2 + 2 * cout * 4 + L * 4)

    out_l1 = pl.pallas_call(
        kernel,
        out_shape=jax.ShapeDtypeStruct((N, cout, L), jnp.bfloat16),
        grid_spec=pltpu.PrefetchScalarGridSpec(
            num_scalar_prefetch=0,
            grid=(N,),
            in_specs=[
                pl.BlockSpec((1, cin, L), lambda n: (n, 0, 0)),    # x (W-padded, flat)
                pl.BlockSpec((cout, 9 * cin), lambda n: (0, 0)),   # conv1 taps (2-D)
                pl.BlockSpec((cout, 1), lambda n: (0, 0)),         # bn1 bias
                pl.BlockSpec((cout, 9 * cout), lambda n: (0, 0)),  # conv2 taps (2-D)
                pl.BlockSpec((cout, 1), lambda n: (0, 0)),         # bn2 bias
                pl.BlockSpec((1, L), lambda n: (0, 0)),            # pad-column mask
            ],
            out_specs=pl.BlockSpec((1, cout, L), lambda n: (n, 0, 0)),
            scratch_shapes=[
                pltpu.VMEM((cin, padlen), jnp.bfloat16),     # padded input (flat)
                pltpu.VMEM((cout, padlen), jnp.bfloat16),    # padded conv1 output
                pltpu.VMEM((9 * cin, L), jnp.bfloat16),      # im2col operand
            ],
        ),
        compiler_params=pltpu.CompilerParams(
            dimension_semantics=("parallel",)),
        cost_estimate=pl.CostEstimate(
            flops=flops, transcendentals=0, bytes_accessed=bytes_accessed),
    )(x_l1, w1_2d, b1c, w2_2d, b2c, col_mask)

    # Drop the 2 pad columns of every row and restore NCHW / f32.
    out = out_l1.reshape(N, cout, H, Wp)[:, :, :, :W]
    return out.astype(jnp.float32)


def basic_block_reference(x, params):
    """Pure-JAX NCHW reference mirroring the PyTorch forward (eval-mode BN)."""
    def conv(x, w):
        return lax.conv_general_dilated(
            x, w, window_strides=(1, 1), padding=((1, 1), (1, 1)),
            dimension_numbers=("NCHW", "OIHW", "NCHW"))

    def bn(x, p, eps=1e-5):
        gamma, beta, mean, var = p
        s = gamma / jnp.sqrt(var + eps)
        b = beta - mean * s
        return x * s[None, :, None, None] + b[None, :, None, None]

    identity = x
    out = conv(x, params["w1"])
    out = jnp.maximum(bn(out, params["bn1"]), 0.0)
    out = conv(out, params["w2"])
    out = bn(out, params["bn2"])
    out = out + identity
    return jnp.maximum(out, 0.0)


if __name__ == "__main__":
    # Small deterministic config: inplanes = planes = 4, stride = 1, no downsample.
    N, C, H, W = 2, 4, 16, 16
    key = jax.random.PRNGKey(0)
    k = jax.random.split(key, 11)

    x = jax.random.normal(k[0], (N, C, H, W), jnp.float32)

    params = {
        "w1": 0.1 * jax.random.normal(k[1], (C, C, 3, 3), jnp.float32),
        "w2": 0.1 * jax.random.normal(k[2], (C, C, 3, 3), jnp.float32),
        "bn1": (
            1.0 + 0.1 * jax.random.normal(k[3], (C,), jnp.float32),              # gamma
            0.1 * jax.random.normal(k[4], (C,), jnp.float32),                    # beta
            0.1 * jax.random.normal(k[5], (C,), jnp.float32),                    # running_mean
            1.0 + 0.1 * jnp.abs(jax.random.normal(k[6], (C,), jnp.float32)),     # running_var
        ),
        "bn2": (
            1.0 + 0.1 * jax.random.normal(k[7], (C,), jnp.float32),
            0.1 * jax.random.normal(k[8], (C,), jnp.float32),
            0.1 * jax.random.normal(k[9], (C,), jnp.float32),
            1.0 + 0.1 * jnp.abs(jax.random.normal(k[10], (C,), jnp.float32)),
        ),
    }

    out = jax.block_until_ready(basic_block_forward(x, params))
    ref = jax.block_until_ready(basic_block_reference(x, params))

    assert out.shape == (N, C, H, W)
    # Activations cross HBM as bf16 and the MXU operands are bf16 (f32
    # accumulation), so expect ~1e-2-scale absolute deviations vs the f32 ref.
    assert jnp.allclose(out, ref, atol=5e-2, rtol=5e-2), (
        "mismatch vs reference: max |diff| = %g"
        % float(jnp.max(jnp.abs(out - ref))))

    print("KERNEL_OK")
</pallas_src>

<mosaic_0001>
module attributes {stable_mosaic.version = 11 : i64} {
  func.func @basic_block_kernel(%arg0: i32, %arg1: memref<1x4x288xbf16, #tpu.memory_space<vmem>>, %arg2: memref<4x36xbf16, #tpu.memory_space<vmem>>, %arg3: memref<4x1xf32, #tpu.memory_space<vmem>>, %arg4: memref<4x36xbf16, #tpu.memory_space<vmem>>, %arg5: memref<4x1xf32, #tpu.memory_space<vmem>>, %arg6: memref<1x288xf32, #tpu.memory_space<vmem>>, %arg7: memref<1x4x288xbf16, #tpu.memory_space<vmem>>, %arg8: memref<4x342xbf16, #tpu.memory_space<vmem>>, %arg9: memref<4x342xbf16, #tpu.memory_space<vmem>>, %arg10: memref<36x288xbf16, #tpu.memory_space<vmem>>) attributes {dimension_semantics = [#tpu.dimension_semantics<parallel>], iteration_bounds = array<i64: 2>, scalar_prefetch = 0 : i64, scratch_operands = 3 : i64, tpu.core_type = #tpu.core_type<tc>, window_params = [{transform_indices = @transform_0, window_bounds = array<i64: 1, 4, 288>}, {pipeline_mode = #tpu.pipeline_mode<synchronous>, transform_indices = @transform_1, window_bounds = array<i64: 4, 36>}, {pipeline_mode = #tpu.pipeline_mode<synchronous>, transform_indices = @transform_2, window_bounds = array<i64: 4, 1>}, {pipeline_mode = #tpu.pipeline_mode<synchronous>, transform_indices = @transform_3, window_bounds = array<i64: 4, 36>}, {pipeline_mode = #tpu.pipeline_mode<synchronous>, transform_indices = @transform_4, window_bounds = array<i64: 4, 1>}, {pipeline_mode = #tpu.pipeline_mode<synchronous>, transform_indices = @transform_5, window_bounds = array<i64: 1, 288>}, {transform_indices = @transform_6, window_bounds = array<i64: 1, 4, 288>}]} {
    %cst = arith.constant 0.000000e+00 : bf16
    %0 = vector.broadcast %cst : bf16 to vector<4x19xbf16>
    %c0 = arith.constant 0 : index
    %c0_0 = arith.constant 0 : index
    %1 = vector.load %arg8[%c0, %c0_0] : memref<4x342xbf16, #tpu.memory_space<vmem>>, vector<4x19xbf16>
    tpu.vector_store %arg8[%c0, %c0_0], %0 {strides = array<i32>} : memref<4x342xbf16, #tpu.memory_space<vmem>>, vector<4x19xbf16>,
    %cst_1 = arith.constant 0.000000e+00 : bf16
    %2 = vector.broadcast %cst_1 : bf16 to vector<4x35xbf16>
    %c0_2 = arith.constant 0 : index
    %c307 = arith.constant 307 : index
    %3 = vector.load %arg8[%c0_2, %c307] : memref<4x342xbf16, #tpu.memory_space<vmem>>, vector<4x35xbf16>
    tpu.vector_store %arg8[%c0_2, %c307], %2 {strides = array<i32>} : memref<4x342xbf16, #tpu.memory_space<vmem>>, vector<4x35xbf16>,
    %cst_3 = arith.constant 0.000000e+00 : bf16
    %4 = vector.broadcast %cst_3 : bf16 to vector<4x19xbf16>
    %c0_4 = arith.constant 0 : index
    %c0_5 = arith.constant 0 : index
    %5 = vector.load %arg9[%c0_4, %c0_5] : memref<4x342xbf16, #tpu.memory_space<vmem>>, vector<4x19xbf16>
    tpu.vector_store %arg9[%c0_4, %c0_5], %4 {strides = array<i32>} : memref<4x342xbf16, #tpu.memory_space<vmem>>, vector<4x19xbf16>,
    %cst_6 = arith.constant 0.000000e+00 : bf16
    %6 = vector.broadcast %cst_6 : bf16 to vector<4x35xbf16>
    %c0_7 = arith.constant 0 : index
    %c307_8 = arith.constant 307 : index
    %7 = vector.load %arg9[%c0_7, %c307_8] : memref<4x342xbf16, #tpu.memory_space<vmem>>, vector<4x35xbf16>
    tpu.vector_store %arg9[%c0_7, %c307_8], %6 {strides = array<i32>} : memref<4x342xbf16, #tpu.memory_space<vmem>>, vector<4x35xbf16>,
    %c0_9 = arith.constant 0 : index
    %c0_10 = arith.constant 0 : index
    %c0_11 = arith.constant 0 : index
    %8 = vector.load %arg1[%c0_9, %c0_10, %c0_11] : memref<1x4x288xbf16, #tpu.memory_space<vmem>>, vector<1x4x288xbf16>
    %9 = vector.shape_cast %8 : vector<1x4x288xbf16> to vector<4x288xbf16>
    %c0_12 = arith.constant 0 : index
    %c19 = arith.constant 19 : index
    %10 = vector.load %arg8[%c0_12, %c19] : memref<4x342xbf16, #tpu.memory_space<vmem>>, vector<4x288xbf16>
    tpu.vector_store %arg8[%c0_12, %c19], %9 {strides = array<i32>} : memref<4x342xbf16, #tpu.memory_space<vmem>>, vector<4x288xbf16>,
    %c0_13 = arith.constant 0 : index
    %c0_14 = arith.constant 0 : index
    %11 = vector.load %arg6[%c0_13, %c0_14] : memref<1x288xf32, #tpu.memory_space<vmem>>, vector<1x288xf32>
    %c0_15 = arith.constant 0 : index
    %c0_16 = arith.constant 0 : index
    %12 = vector.load %arg8[%c0_15, %c0_16] : memref<4x342xbf16, #tpu.memory_space<vmem>>, vector<4x288xbf16>
    %c0_17 = arith.constant 0 : index
    %c0_18 = arith.constant 0 : index
    %13 = vector.load %arg10[%c0_17, %c0_18] : memref<36x288xbf16, #tpu.memory_space<vmem>>, vector<4x288xbf16>
    tpu.vector_store %arg10[%c0_17, %c0_18], %12 {strides = array<i32>} : memref<36x288xbf16, #tpu.memory_space<vmem>>, vector<4x288xbf16>,
    %c0_19 = arith.constant 0 : index
    %c1 = arith.constant 1 : index
    %14 = vector.load %arg8[%c0_19, %c1] : memref<4x342xbf16, #tpu.memory_space<vmem>>, vector<4x288xbf16>
    %c4 = arith.constant 4 : index
    %c0_20 = arith.constant 0 : index
    %15 = vector.load %arg10[%c4, %c0_20] : memref<36x288xbf16, #tpu.memory_space<vmem>>, vector<4x288xbf16>
    tpu.vector_store %arg10[%c4, %c0_20], %14 {strides = array<i32>} : memref<36x288xbf16, #tpu.memory_space<vmem>>, vector<4x288xbf16>,
    %c0_21 = arith.constant 0 : index
    %c2 = arith.constant 2 : index
    %16 = vector.load %arg8[%c0_21, %c2] : memref<4x342xbf16, #tpu.memory_space<vmem>>, vector<4x288xbf16>
    %c8 = arith.constant 8 : index
    %c0_22 = arith.constant 0 : index
    %17 = vector.load %arg10[%c8, %c0_22] : memref<36x288xbf16, #tpu.memory_space<vmem>>, vector<4x288xbf16>
    tpu.vector_store %arg10[%c8, %c0_22], %16 {strides = array<i32>} : memref<36x288xbf16, #tpu.memory_space<vmem>>, vector<4x288xbf16>,
    %c0_23 = arith.constant 0 : index
    %c18 = arith.constant 18 : index
    %18 = vector.load %arg8[%c0_23, %c18] : memref<4x342xbf16, #tpu.memory_space<vmem>>, vector<4x288xbf16>
    %c12 = arith.constant 12 : index
    %c0_24 = arith.constant 0 : index
    %19 = vector.load %arg10[%c12, %c0_24] : memref<36x288xbf16, #tpu.memory_space<vmem>>, vector<4x288xbf16>
    tpu.vector_store %arg10[%c12, %c0_24], %18 {strides = array<i32>} : memref<36x288xbf16, #tpu.memory_space<vmem>>, vector<4x288xbf16>,
    %c0_25 = arith.constant 0 : index
    %c19_26 = arith.constant 19 : index
    %20 = vector.load %arg8[%c0_25, %c19_26] : memref<4x342xbf16, #tpu.memory_space<vmem>>, vector<4x288xbf16>
    %c16 = arith.constant 16 : index
    %c0_27 = arith.constant 0 : index
    %21 = vector.load %arg10[%c16, %c0_27] : memref<36x288xbf16, #tpu.memory_space<vmem>>, vector<4x288xbf16>
    tpu.vector_store %arg10[%c16, %c0_27], %20 {strides = array<i32>} : memref<36x288xbf16, #tpu.memory_space<vmem>>, vector<4x288xbf16>,
    %c0_28 = arith.constant 0 : index
    %c20 = arith.constant 20 : index
    %22 = vector.load %arg8[%c0_28, %c20] : memref<4x342xbf16, #tpu.memory_space<vmem>>, vector<4x288xbf16>
    %c20_29 = arith.constant 20 : index
    %c0_30 = arith.constant 0 : index
    %23 = vector.load %arg10[%c20_29, %c0_30] : memref<36x288xbf16, #tpu.memory_space<vmem>>, vector<4x288xbf16>
    tpu.vector_store %arg10[%c20_29, %c0_30], %22 {strides = array<i32>} : memref<36x288xbf16, #tpu.memory_space<vmem>>, vector<4x288xbf16>,
    %c0_31 = arith.constant 0 : index
    %c36 = arith.constant 36 : index
    %24 = vector.load %arg8[%c0_31, %c36] : memref<4x342xbf16, #tpu.memory_space<vmem>>, vector<4x288xbf16>
    %c24 = arith.constant 24 : index
    %c0_32 = arith.constant 0 : index
    %25 = vector.load %arg10[%c24, %c0_32] : memref<36x288xbf16, #tpu.memory_space<vmem>>, vector<4x288xbf16>
    tpu.vector_store %arg10[%c24, %c0_32], %24 {strides = array<i32>} : memref<36x288xbf16, #tpu.memory_space<vmem>>, vector<4x288xbf16>,
    %c0_33 = arith.constant 0 : index
    %c37 = arith.constant 37 : index
    %26 = vector.load %arg8[%c0_33, %c37] : memref<4x342xbf16, #tpu.memory_space<vmem>>, vector<4x288xbf16>
    %c28 = arith.constant 28 : index
    %c0_34 = arith.constant 0 : index
    %27 = vector.load %arg10[%c28, %c0_34] : memref<36x288xbf16, #tpu.memory_space<vmem>>, vector<4x288xbf16>
    tpu.vector_store %arg10[%c28, %c0_34], %26 {strides = array<i32>} : memref<36x288xbf16, #tpu.memory_space<vmem>>, vector<4x288xbf16>,
    %c0_35 = arith.constant 0 : index
    %c38 = arith.constant 38 : index
    %28 = vector.load %arg8[%c0_35, %c38] : memref<4x342xbf16, #tpu.memory_space<vmem>>, vector<4x288xbf16>
    %c32 = arith.constant 32 : index
    %c0_36 = arith.constant 0 : index
    %29 = vector.load %arg10[%c32, %c0_36] : memref<36x288xbf16, #tpu.memory_space<vmem>>, vector<4x288xbf16>
    tpu.vector_store %arg10[%c32, %c0_36], %28 {strides = array<i32>} : memref<36x288xbf16, #tpu.memory_space<vmem>>, vector<4x288xbf16>,
    %c0_37 = arith.constant 0 : index
    %c0_38 = arith.constant 0 : index
    %30 = vector.load %arg2[%c0_37, %c0_38] : memref<4x36xbf16, #tpu.memory_space<vmem>>, vector<4x36xbf16>
    %c0_39 = arith.constant 0 : index
    %c0_40 = arith.constant 0 : index
    %31 = vector.load %arg10[%c0_39, %c0_40] : memref<36x288xbf16, #tpu.memory_space<vmem>>, vector<36x288xbf16>
    %cst_41 = arith.constant dense<0.000000e+00> : vector<4x288xf32>
    %32 = tpu.matmul %30, %31, %cst_41 {dimension_numbers = #tpu.dot_dimension_numbers<[1], [0], [0], [1], [0, 0, 1, 1], [], []>} : vector<4x36xbf16>, vector<36x288xbf16>, vector<4x288xf32> -> vector<4x288xf32>
    %c0_42 = arith.constant 0 : index
    %c0_43 = arith.constant 0 : index
    %33 = vector.load %arg3[%c0_42, %c0_43] : memref<4x1xf32, #tpu.memory_space<vmem>>, vector<4x1xf32>
    %34 = vector.broadcast %33 : vector<4x1xf32> to vector<4x288xf32>
    %35 = arith.addf %32, %34 : vector<4x288xf32>
    %cst_44 = arith.constant 0.000000e+00 : f32
    %36 = vector.broadcast %cst_44 : f32 to vector<4x288xf32>
    %37 = arith.maximumf %35, %36 : vector<4x288xf32>
    %38 = vector.broadcast %11 : vector<1x288xf32> to vector<4x288xf32>
    %39 = arith.mulf %37, %38 : vector<4x288xf32>
    %40 = arith.truncf %39 : vector<4x288xf32> to vector<4x288xbf16>
    %c0_45 = arith.constant 0 : index
    %c19_46 = arith.constant 19 : index
    %41 = vector.load %arg9[%c0_45, %c19_46] : memref<4x342xbf16, #tpu.memory_space<vmem>>, vector<4x288xbf16>
    tpu.vector_store %arg9[%c0_45, %c19_46], %40 {strides = array<i32>} : memref<4x342xbf16, #tpu.memory_space<vmem>>, vector<4x288xbf16>,
    %c0_47 = arith.constant 0 : index
    %c0_48 = arith.constant 0 : index
    %42 = vector.load %arg9[%c0_47, %c0_48] : memref<4x342xbf16, #tpu.memory_space<vmem>>, vector<4x288xbf16>
    %c0_49 = arith.constant 0 : index
    %c0_50 = arith.constant 0 : index
    %43 = vector.load %arg10[%c0_49, %c0_50] : memref<36x288xbf16, #tpu.memory_space<vmem>>, vector<4x288xbf16>
    tpu.vector_store %arg10[%c0_49, %c0_50], %42 {strides = array<i32>} : memref<36x288xbf16, #tpu.memory_space<vmem>>, vector<4x288xbf16>,
    %c0_51 = arith.constant 0 : index
    %c1_52 = arith.constant 1 : index
    %44 = vector.load %arg9[%c0_51, %c1_52] : memref<4x342xbf16, #tpu.memory_space<vmem>>, vector<4x288xbf16>
    %c4_53 = arith.constant 4 : index
    %c0_54 = arith.constant 0 : index
    %45 = vector.load %arg10[%c4_53, %c0_54] : memref<36x288xbf16, #tpu.memory_space<vmem>>, vector<4x288xbf16>
    tpu.vector_store %arg10[%c4_53, %c0_54], %44 {strides = array<i32>} : memref<36x288xbf16, #tpu.memory_space<vmem>>, vector<4x288xbf16>,
    %c0_55 = arith.constant 0 : index
    %c2_56 = arith.constant 2 : index
    %46 = vector.load %arg9[%c0_55, %c2_56] : memref<4x342xbf16, #tpu.memory_space<vmem>>, vector<4x288xbf16>
    %c8_57 = arith.constant 8 : index
    %c0_58 = arith.constant 0 : index
    %47 = vector.load %arg10[%c8_57, %c0_58] : memref<36x288xbf16, #tpu.memory_space<vmem>>, vector<4x288xbf16>
    tpu.vector_store %arg10[%c8_57, %c0_58], %46 {strides = array<i32>} : memref<36x288xbf16, #tpu.memory_space<vmem>>, vector<4x288xbf16>,
    %c0_59 = arith.constant 0 : index
    %c18_60 = arith.constant 18 : index
    %48 = vector.load %arg9[%c0_59, %c18_60] : memref<4x342xbf16, #tpu.memory_space<vmem>>, vector<4x288xbf16>
    %c12_61 = arith.constant 12 : index
    %c0_62 = arith.constant 0 : index
    %49 = vector.load %arg10[%c12_61, %c0_62] : memref<36x288xbf16, #tpu.memory_space<vmem>>, vector<4x288xbf16>
    tpu.vector_store %arg10[%c12_61, %c0_62], %48 {strides = array<i32>} : memref<36x288xbf16, #tpu.memory_space<vmem>>, vector<4x288xbf16>,
    %c0_63 = arith.constant 0 : index
    %c19_64 = arith.constant 19 : index
    %50 = vector.load %arg9[%c0_63, %c19_64] : memref<4x342xbf16, #tpu.memory_space<vmem>>, vector<4x288xbf16>
    %c16_65 = arith.constant 16 : index
    %c0_66 = arith.constant 0 : index
    %51 = vector.load %arg10[%c16_65, %c0_66] : memref<36x288xbf16, #tpu.memory_space<vmem>>, vector<4x288xbf16>
    tpu.vector_store %arg10[%c16_65, %c0_66], %50 {strides = array<i32>} : memref<36x288xbf16, #tpu.memory_space<vmem>>, vector<4x288xbf16>,
    %c0_67 = arith.constant 0 : index
    %c20_68 = arith.constant 20 : index
    %52 = vector.load %arg9[%c0_67, %c20_68] : memref<4x342xbf16, #tpu.memory_space<vmem>>, vector<4x288xbf16>
    %c20_69 = arith.constant 20 : index
    %c0_70 = arith.constant 0 : index
    %53 = vector.load %arg10[%c20_69, %c0_70] : memref<36x288xbf16, #tpu.memory_space<vmem>>, vector<4x288xbf16>
    tpu.vector_store %arg10[%c20_69, %c0_70], %52 {strides = array<i32>} : memref<36x288xbf16, #tpu.memory_space<vmem>>, vector<4x288xbf16>,
    %c0_71 = arith.constant 0 : index
    %c36_72 = arith.constant 36 : index
    %54 = vector.load %arg9[%c0_71, %c36_72] : memref<4x342xbf16, #tpu.memory_space<vmem>>, vector<4x288xbf16>
    %c24_73 = arith.constant 24 : index
    %c0_74 = arith.constant 0 : index
    %55 = vector.load %arg10[%c24_73, %c0_74] : memref<36x288xbf16, #tpu.memory_space<vmem>>, vector<4x288xbf16>
    tpu.vector_store %arg10[%c24_73, %c0_74], %54 {strides = array<i32>} : memref<36x288xbf16, #tpu.memory_space<vmem>>, vector<4x288xbf16>,
    %c0_75 = arith.constant 0 : index
    %c37_76 = arith.constant 37 : index
    %56 = vector.load %arg9[%c0_75, %c37_76] : memref<4x342xbf16, #tpu.memory_space<vmem>>, vector<4x288xbf16>
    %c28_77 = arith.constant 28 : index
    %c0_78 = arith.constant 0 : index
    %57 = vector.load %arg10[%c28_77, %c0_78] : memref<36x288xbf16, #tpu.memory_space<vmem>>, vector<4x288xbf16>
    tpu.vector_store %arg10[%c28_77, %c0_78], %56 {strides = array<i32>} : memref<36x288xbf16, #tpu.memory_space<vmem>>, vector<4x288xbf16>,
    %c0_79 = arith.constant 0 : index
    %c38_80 = arith.constant 38 : index
    %58 = vector.load %arg9[%c0_79, %c38_80] : memref<4x342xbf16, #tpu.memory_space<vmem>>, vector<4x288xbf16>
    %c32_81 = arith.constant 32 : index
    %c0_82 = arith.constant 0 : index
    %59 = vector.load %arg10[%c32_81, %c0_82] : memref<36x288xbf16, #tpu.memory_space<vmem>>, vector<4x288xbf16>
    tpu.vector_store %arg10[%c32_81, %c0_82], %58 {strides = array<i32>} : memref<36x288xbf16, #tpu.memory_space<vmem>>, vector<4x288xbf16>,
    %c0_83 = arith.constant 0 : index
    %c0_84 = arith.constant 0 : index
    %60 = vector.load %arg4[%c0_83, %c0_84] : memref<4x36xbf16, #tpu.memory_space<vmem>>, vector<4x36xbf16>
    %c0_85 = arith.constant 0 : index
    %c0_86 = arith.constant 0 : index
    %61 = vector.load %arg10[%c0_85, %c0_86] : memref<36x288xbf16, #tpu.memory_space<vmem>>, vector<36x288xbf16>
    %cst_87 = arith.constant dense<0.000000e+00> : vector<4x288xf32>
    %62 = tpu.matmul %60, %61, %cst_87 {dimension_numbers = #tpu.dot_dimension_numbers<[1], [0], [0], [1], [0, 0, 1, 1], [], []>} : vector<4x36xbf16>, vector<36x288xbf16>, vector<4x288xf32> -> vector<4x288xf32>
    %c0_88 = arith.constant 0 : index
    %c0_89 = arith.constant 0 : index
    %63 = vector.load %arg5[%c0_88, %c0_89] : memref<4x1xf32, #tpu.memory_space<vmem>>, vector<4x1xf32>
    %64 = vector.broadcast %63 : vector<4x1xf32> to vector<4x288xf32>
    %65 = arith.addf %62, %64 : vector<4x288xf32>
    %66 = arith.extf %9 : vector<4x288xbf16> to vector<4x288xf32>
    %67 = arith.addf %65, %66 : vector<4x288xf32>
    %cst_90 = arith.constant 0.000000e+00 : f32
    %68 = vector.broadcast %cst_90 : f32 to vector<4x288xf32>
    %69 = arith.maximumf %67, %68 : vector<4x288xf32>
    %70 = arith.truncf %69 : vector<4x288xf32> to vector<4x288xbf16>
    %c0_91 = arith.constant 0 : index
    %c0_92 = arith.constant 0 : index
    %c0_93 = arith.constant 0 : index
    %71 = vector.load %arg7[%c0_91, %c0_92, %c0_93] : memref<1x4x288xbf16, #tpu.memory_space<vmem>>, vector<1x4x288xbf16>
    %72 = vector.shape_cast %71 : vector<1x4x288xbf16> to vector<4x288xbf16>
    %73 = vector.shape_cast %70 : vector<4x288xbf16> to vector<1x4x288xbf16>
    tpu.vector_store %arg7[%c0_91, %c0_92, %c0_93], %73 {strides = array<i32>} : memref<1x4x288xbf16, #tpu.memory_space<vmem>>, vector<1x4x288xbf16>,
    return
  }
  func.func @transform_0(%arg0: i32) -> (i32, i32, i32) {
    %c0_i32 = arith.constant 0 : i32
    %c0_i32_0 = arith.constant 0 : i32
    %c0_i32_1 = arith.constant 0 : i32
    return %arg0, %c0_i32, %c0_i32_0 : i32, i32, i32
  }
  func.func @transform_1(%arg0: i32) -> (i32, i32) {
    %c0_i32 = arith.constant 0 : i32
    %c0_i32_0 = arith.constant 0 : i32
    %c0_i32_1 = arith.constant 0 : i32
    return %c0_i32, %c0_i32_0 : i32, i32
  }
  func.func @transform_2(%arg0: i32) -> (i32, i32) {
    %c0_i32 = arith.constant 0 : i32
    %c0_i32_0 = arith.constant 0 : i32
    %c0_i32_1 = arith.constant 0 : i32
    return %c0_i32, %c0_i32_0 : i32, i32
  }
  func.func @transform_3(%arg0: i32) -> (i32, i32) {
    %c0_i32 = arith.constant 0 : i32
    %c0_i32_0 = arith.constant 0 : i32
    %c0_i32_1 = arith.constant 0 : i32
    return %c0_i32, %c0_i32_0 : i32, i32
  }
  func.func @transform_4(%arg0: i32) -> (i32, i32) {
    %c0_i32 = arith.constant 0 : i32
    %c0_i32_0 = arith.constant 0 : i32
    %c0_i32_1 = arith.constant 0 : i32
    return %c0_i32, %c0_i32_0 : i32, i32
  }
  func.func @transform_5(%arg0: i32) -> (i32, i32) {
    %c0_i32 = arith.constant 0 : i32
    %c0_i32_0 = arith.constant 0 : i32
    %c0_i32_1 = arith.constant 0 : i32
    return %c0_i32, %c0_i32_0 : i32, i32
  }
  func.func @transform_6(%arg0: i32) -> (i32, i32, i32) {
    %c0_i32 = arith.constant 0 : i32
    %c0_i32_0 = arith.constant 0 : i32
    %c0_i32_1 = arith.constant 0 : i32
    return %arg0, %c0_i32, %c0_i32_0 : i32, i32, i32
  }
}

</mosaic_0001>

<llo_original>
// kernel: tpu_custom_call.1
$region0: #{tpu_custom_call.1}
  #allocation0 [shape = 'u32[]', space=smem, size = 0x4, offset = 0x4, fixed_abs, tag = 'smem constant byte address 0x4 - core index']
  #allocation1 [shape = 'u32[144,128]{1,0:T(1,128)}', space=vmem, size = 0x12000, scoped, tag = 'internal scratch']
  #allocation2 [shape = 'bf16[4,342]{1,0:T(4,128)(2,1)}', space=vmem, size = 0xc00, scoped, tag = 'scratch operand']
  #allocation3 [shape = 'bf16[4,342]{1,0:T(4,128)(2,1)}', space=vmem, size = 0xc00, scoped, tag = 'scratch operand']
  #allocation4 [shape = 'bf16[36,288]{1,0:T(8,128)(2,1)}', space=vmem, size = 0x7800, scoped, tag = 'scratch operand']
  %s0 = inlined_call_operand.hbm [shape: bf16[2,4,288], index: 0, kind: input, shape index: {}]
  %s1 = inlined_call_operand.vmem [shape: bf16[4,36], index: 1, kind: input, shape index: {}]
  %s2 = inlined_call_operand.vmem [shape: f32[4,1], index: 2, kind: input, shape index: {}]
  %s3 = inlined_call_operand.vmem [shape: bf16[4,36], index: 3, kind: input, shape index: {}]
  %s4 = inlined_call_operand.vmem [shape: f32[4,1], index: 4, kind: input, shape index: {}]
  %s5 = inlined_call_operand.vmem [shape: f32[1,288], index: 5, kind: input, shape index: {}]
  %s6 = inlined_call_operand.hbm [shape: bf16[2,4,288], index: 6, kind: output, shape index: {}]
  %s7 = sld [smem:[#allocation0]]
  $region61: #{tpu_custom_call.1} parent=0
    _
  %s9 = ssub.s32 1, %s7
  %s10 = scalar_select 0, %s9, %s7
  $region1: #{tpu_custom_call.1} parent=0
    #allocation5 [shape = 'u8[6144]{0}', space=vmem, size = 0x1800, scoped, tag = 'input window, operand 0']
    #allocation6 [shape = 's32[2]{0}', space=sflag, size = 0x8, scoped, tag = 'scoped memory for tpu_custom_call.1']
    #allocation7 [shape = 's32[2]{0}', space=sflag, size = 0x8, scoped, tag = 'scoped memory for tpu_custom_call.1']
    #allocation8 [shape = 'u8[6144]{0}', space=vmem, size = 0x1800, scoped, tag = 'output window, operand 0']
    %11 = vsyncpa [#allocation6], 0
    %s12 = scalar_lea.sflag [#allocation6], 1
    %13 = vsyncpa %s12, 0
    %14 = vsyncpa [#allocation7], 0
    %s15 = scalar_lea.sflag [#allocation7], 1
    %16 = vsyncpa %s15, 0
    loop: start=0, step=1, limit=4
    $region2: #{tpu_custom_call.1} parent=1 // loop_pre_header
      _
    $region3: #{tpu_custom_call.1} parent=1 // loop_header
      %s18 = sphi 0, %s22
      %p19 = scmp.ge.s32.totalorder %s18, 4
      %s28 = sphi 0, %s30
      %s31 = sphi 0, %s28
      %s32 = sphi 0, %s31
      %s48 = sphi 0, %s32
      %s52 = sphi 0, %s52
      %s54 = sphi 0, %s52
      %s55 = sphi 0, %s54
      %s69 = sphi 0, %s55
      %s73 = sphi 0, %s73
      %s75 = sphi 0, %s73
      %s76 = sphi 0, %s75
      %s90 = sphi 0, %s76
      %s94 = sphi 0, %s94
      %s96 = sphi 0, %s94
      %s97 = sphi 0, %s96
      %s111 = sphi 0, %s97
      %s115 = sphi 0, %s115
      %s117 = sphi 0, %s115
      %s118 = sphi 0, %s117
      %s132 = sphi 0, %s118
      %s136 = sphi 0, %s136
      %s138 = sphi 0, %s136
      %s139 = sphi 0, %s138
      %s153 = sphi 0, %s139
      %s159 = sphi 0, %s161
      %s162 = sphi 0, %s159
      %s163 = sphi 0, %s162
      %s179 = sphi 0, %s163
    $region4: #{tpu_custom_call.1} parent=1 // loop_header_branch
      %21 = sbr.rel (%p19) target = $region8
    $region5: #{tpu_custom_call.1} parent=1 // loop_body
      %s23 = ssub.s32 %s18, 1
      %s24 = ssub.s32 %s18, 2
      %s25 = sadd.s32 %s18, 1
      %s26 = ssub.s32 %s18, %s25
      %p27 = scmp.eq.s32.totalorder %s26, 0
      %s29 = sadd.s32 %s28, 1
      %s30 = scalar_select %p27, %s28, %s29
      %p33 = pneg %p27
      %p34 = scmp.eq.s32.totalorder %s18, 1
      %p35 = por %p33, %p34
      %p36 = scmp.ne.s32.totalorder %s28, %s31
      %p37 = scmp.eq.s32.totalorder %s18, 0
      %p38 = por %p36, %p37
      %p39 = scmp.ne.s32.totalorder %s28, %s31
      %p40 = scmp.eq.s32.totalorder %s23, 1
      %p41 = por %p39, %p40
      %p42 = scmp.ne.s32.totalorder %s31, %s32
      %p43 = scmp.eq.s32.totalorder %s23, 0
      %p44 = por %p42, %p43
      %p45 = scmp.ne.s32.totalorder %s31, %s32
      %p46 = scmp.eq.s32.totalorder %s24, 1
      %p47 = por %p45, %p46
      %p49 = scmp.ne.s32.totalorder %s32, %s48
      %p50 = scmp.eq.s32.totalorder %s24, 0
      %p51 = por %p49, %p50
      %s53 = sadd.s32 %s52, 1
      %p56 = scmp.eq.s32.totalorder %s18, 1
      %p57 = scmp.ne.s32.totalorder %s52, %s54
      %p58 = scmp.eq.s32.totalorder %s18, 0
      %p59 = por %p57, %p58
      %p60 = scmp.ne.s32.totalorder %s52, %s54
      %p61 = scmp.eq.s32.totalorder %s23, 1
      %p62 = por %p60, %p61
      %p63 = scmp.ne.s32.totalorder %s54, %s55
      %p64 = scmp.eq.s32.totalorder %s23, 0
      %p65 = por %p63, %p64
      %p66 = scmp.ne.s32.totalorder %s54, %s55
      %p67 = scmp.eq.s32.totalorder %s24, 1
      %p68 = por %p66, %p67
      %p70 = scmp.ne.s32.totalorder %s55, %s69
      %p71 = scmp.eq.s32.totalorder %s24, 0
      %p72 = por %p70, %p71
      %s74 = sadd.s32 %s73, 1
      %p77 = scmp.eq.s32.totalorder %s18, 1
      %p78 = scmp.ne.s32.totalorder %s73, %s75
      %p79 = scmp.eq.s32.totalorder %s18, 0
      %p80 = por %p78, %p79
      %p81 = scmp.ne.s32.totalorder %s73, %s75
      %p82 = scmp.eq.s32.totalorder %s23, 1
      %p83 = por %p81, %p82
      %p84 = scmp.ne.s32.totalorder %s75, %s76
      %p85 = scmp.eq.s32.totalorder %s23, 0
      %p86 = por %p84, %p85
      %p87 = scmp.ne.s32.totalorder %s75, %s76
      %p88 = scmp.eq.s32.totalorder %s24, 1
      %p89 = por %p87, %p88
      %p91 = scmp.ne.s32.totalorder %s76, %s90
      %p92 = scmp.eq.s32.totalorder %s24, 0
      %p93 = por %p91, %p92
      %s95 = sadd.s32 %s94, 1
      %p98 = scmp.eq.s32.totalorder %s18, 1
      %p99 = scmp.ne.s32.totalorder %s94, %s96
      %p100 = scmp.eq.s32.totalorder %s18, 0
      %p101 = por %p99, %p100
      %p102 = scmp.ne.s32.totalorder %s94, %s96
      %p103 = scmp.eq.s32.totalorder %s23, 1
      %p104 = por %p102, %p103
      %p105 = scmp.ne.s32.totalorder %s96, %s97
      %p106 = scmp.eq.s32.totalorder %s23, 0
      %p107 = por %p105, %p106
      %p108 = scmp.ne.s32.totalorder %s96, %s97
      %p109 = scmp.eq.s32.totalorder %s24, 1
      %p110 = por %p108, %p109
      %p112 = scmp.ne.s32.totalorder %s97, %s111
      %p113 = scmp.eq.s32.totalorder %s24, 0
      %p114 = por %p112, %p113
      %s116 = sadd.s32 %s115, 1
      %p119 = scmp.eq.s32.totalorder %s18, 1
      %p120 = scmp.ne.s32.totalorder %s115, %s117
      %p121 = scmp.eq.s32.totalorder %s18, 0
      %p122 = por %p120, %p121
      %p123 = scmp.ne.s32.totalorder %s115, %s117
      %p124 = scmp.eq.s32.totalorder %s23, 1
      %p125 = por %p123, %p124
      %p126 = scmp.ne.s32.totalorder %s117, %s118
      %p127 = scmp.eq.s32.totalorder %s23, 0
      %p128 = por %p126, %p127
      %p129 = scmp.ne.s32.totalorder %s117, %s118
      %p130 = scmp.eq.s32.totalorder %s24, 1
      %p131 = por %p129, %p130
      %p133 = scmp.ne.s32.totalorder %s118, %s132
      %p134 = scmp.eq.s32.totalorder %s24, 0
      %p135 = por %p133, %p134
      %s137 = sadd.s32 %s136, 1
      %p140 = scmp.eq.s32.totalorder %s18, 1
      %p141 = scmp.ne.s32.totalorder %s136, %s138
      %p142 = scmp.eq.s32.totalorder %s18, 0
      %p143 = por %p141, %p142
      %p144 = scmp.ne.s32.totalorder %s136, %s138
      %p145 = scmp.eq.s32.totalorder %s23, 1
      %p146 = por %p144, %p145
      %p147 = scmp.ne.s32.totalorder %s138, %s139
      %p148 = scmp.eq.s32.totalorder %s23, 0
      %p149 = por %p147, %p148
      %p150 = scmp.ne.s32.totalorder %s138, %s139
      %p151 = scmp.eq.s32.totalorder %s24, 1
      %p152 = por %p150, %p151
      %p154 = scmp.ne.s32.totalorder %s139, %s153
      %p155 = scmp.eq.s32.totalorder %s24, 0
      %p156 = por %p154, %p155
      %s157 = ssub.s32 %s18, %s25
      %p158 = scmp.eq.s32.totalorder %s157, 0
      %s160 = sadd.s32 %s159, 1
      %s161 = scalar_select %p158, %s159, %s160
      %p164 = pneg %p158
      %p165 = scmp.eq.s32.totalorder %s18, 1
      %p166 = por %p164, %p165
      %p167 = scmp.ne.s32.totalorder %s159, %s162
      %p168 = scmp.eq.s32.totalorder %s18, 0
      %p169 = por %p167, %p168
      %p170 = scmp.ne.s32.totalorder %s159, %s162
      %p171 = scmp.eq.s32.totalorder %s23, 1
      %p172 = por %p170, %p171
      %p173 = scmp.ne.s32.totalorder %s162, %s163
      %p174 = scmp.eq.s32.totalorder %s23, 0
      %p175 = por %p173, %p174
      %p176 = scmp.ne.s32.totalorder %s162, %s163
      %p177 = scmp.eq.s32.totalorder %s24, 1
      %p178 = por %p176, %p177
      %p180 = scmp.ne.s32.totalorder %s163, %s179
      %p181 = scmp.eq.s32.totalorder %s24, 0
      %p182 = por %p180, %p181
      %p183 = scmp.le.s32.totalorder 1, %s18
      %p184 = scmp.lt.s32.totalorder %s18, 3
      %p185 = pnand %p183, %p184
      %p186 = pneg %p185
      // Predicated region
      $region9: #{tpu_custom_call.1} parent=5 // pred_check
        _
      $region10: #{tpu_custom_call.1} parent=5 // pred_check_branch
        %188 = sbr.rel (%p185) target = $region12
      $region11: #{tpu_custom_call.1} parent=5 // pred_region
        %s189 = ssub.s32 %s18, 1
        // Predicated region
        $region13: #{tpu_custom_call.1} parent=11 // pred_check
          %p190 = pneg %p65
        $region14: #{tpu_custom_call.1} parent=11 // pred_check_branch
          %192 = sbr.rel (%p190) target = $region16
        $region15: #{tpu_custom_call.1} parent=11 // pred_region
          _
        $region16: #{tpu_custom_call.1} parent=11 // pred_fallthru
          _
        // Predicated region
        $region17: #{tpu_custom_call.1} parent=11 // pred_check
          %p193 = pneg %p86
        $region18: #{tpu_custom_call.1} parent=11 // pred_check_branch
          %195 = sbr.rel (%p193) target = $region20
        $region19: #{tpu_custom_call.1} parent=11 // pred_region
          _
        $region20: #{tpu_custom_call.1} parent=11 // pred_fallthru
          _
        // Predicated region
        $region21: #{tpu_custom_call.1} parent=11 // pred_check
          %p196 = pneg %p107
        $region22: #{tpu_custom_call.1} parent=11 // pred_check_branch
          %198 = sbr.rel (%p196) target = $region24
        $region23: #{tpu_custom_call.1} parent=11 // pred_region
          _
        $region24: #{tpu_custom_call.1} parent=11 // pred_fallthru
          _
        // Predicated region
        $region25: #{tpu_custom_call.1} parent=11 // pred_check
          %p199 = pneg %p128
        $region26: #{tpu_custom_call.1} parent=11 // pred_check_branch
          %201 = sbr.rel (%p199) target = $region28
        $region27: #{tpu_custom_call.1} parent=11 // pred_region
          _
        $region28: #{tpu_custom_call.1} parent=11 // pred_fallthru
          _
        // Predicated region
        $region29: #{tpu_custom_call.1} parent=11 // pred_check
          %p202 = pneg %p149
        $region30: #{tpu_custom_call.1} parent=11 // pred_check_branch
          %204 = sbr.rel (%p202) target = $region32
        $region31: #{tpu_custom_call.1} parent=11 // pred_region
          _
        $region32: #{tpu_custom_call.1} parent=11 // pred_fallthru
          _
      $region12: #{tpu_custom_call.1} parent=5 // pred_fallthru
        _
      %p205 = scmp.lt.s32.totalorder %s18, 2
      // Predicated region
      $region33: #{tpu_custom_call.1} parent=5 // pred_check
        %p206 = pneg %p205
      $region34: #{tpu_custom_call.1} parent=5 // pred_check_branch
        %208 = sbr.rel (%p206) target = $region36
      $region35: #{tpu_custom_call.1} parent=5 // pred_region
        // Predicated region
        $region37: #{tpu_custom_call.1} parent=35 // pred_check
          %p209 = pneg %p38
        $region38: #{tpu_custom_call.1} parent=35 // pred_check_branch
          %211 = sbr.rel (%p209) target = $region40
        $region39: #{tpu_custom_call.1} parent=35 // pred_region
          %s212 = sand.u32 %s28, 1
          %s213 = scalar_lea.sflag [#allocation6], %s212
          %s214 = sand.u32 %s28, 1
          %s215 = smul.addr %s214, 6
          %s216 = scalar_lea.vmem [#allocation5], %s215
          %s218 = ssub.s32 96, 96
          %219 = vsyncadd %s213, %s218
          %s220 = smul.addr %s18, 3
          %s221 = smul.addr %s220, 32
          %s222 = scalar_lea.hbm %s0, %s221
          %s224 = sshll.u32 %s216, 4
          %s225 = int_to_ptr.vmem [resolvable:$true] %s224
          %227 = dma.hbm_to_vmem [thread:$0]  %s222, 96, %s225, %s213
        $region40: #{tpu_custom_call.1} parent=35 // pred_fallthru
          _
      $region36: #{tpu_custom_call.1} parent=5 // pred_fallthru
        _
      %p228 = scmp.le.s32.totalorder 1, %s18
      %p229 = scmp.lt.s32.totalorder %s18, 3
      %p230 = pnand %p228, %p229
      %p231 = pneg %p230
      // Predicated region
      $region41: #{tpu_custom_call.1} parent=5 // pred_check
        _
      $region42: #{tpu_custom_call.1} parent=5 // pred_check_branch
        %233 = sbr.rel (%p230) target = $region44
      $region43: #{tpu_custom_call.1} parent=5 // pred_region
        %s234 = ssub.s32 %s18, 1
        %s235 = sand.u32 %s31, 1
        %s236 = scalar_lea.sflag [#allocation6], %s235
        %s237 = sand.u32 %s31, 1
        %s238 = smul.addr %s237, 6
        %s239 = scalar_lea.vmem [#allocation5], %s238
        // Predicated region
        $region45: #{tpu_custom_call.1} parent=43 // pred_check
          %p240 = pneg %p44
        $region46: #{tpu_custom_call.1} parent=43 // pred_check_branch
          %242 = sbr.rel (%p240) target = $region48
        $region47: #{tpu_custom_call.1} parent=43 // pred_region
          %243 = dma.done %s236, 96
        $region48: #{tpu_custom_call.1} parent=43 // pred_fallthru
          _
        %s244 = sand.u32 %s31, 1
        %s245 = scalar_lea.sflag [#allocation6], %s244
        %s246 = sand.u32 %s31, 1
        %s247 = smul.addr %s246, 6
        %s248 = scalar_lea.vmem [#allocation5], %s247
        %p249 = pneg %p44
        %p250 = pneg %p41
        %p251 = pneg %p65
        %p252 = pneg %p62
        %p253 = pneg %p86
        %p254 = pneg %p83
        %p255 = pneg %p107
        %p256 = pneg %p104
        %p257 = pneg %p128
        %p258 = pneg %p125
        %p259 = pneg %p149
        %p260 = pneg %p146
        %p261 = pneg %p175
        %p262 = pneg %p172
        %s263 = sand.u32 %s162, 1
        %s264 = scalar_lea.sflag [#allocation7], %s263
        %s265 = sand.u32 %s162, 1
        %s266 = smul.addr %s265, 6
        %s267 = scalar_lea.vmem [#allocation8], %s266
        %vm269 = vcmask 148480
        %270 = vst.msk [vmem:[#allocation2] sm:$0x3] %vm269, 0
        %vm271 = vcmask 697752
        %272 = vst.msk [vmem:[#allocation2 + $0x4] sm:$0x3] %vm271, 0
        %273 = vst.msk [vmem:[#allocation3] sm:$0x3] %vm269, 0
        %274 = vst.msk [vmem:[#allocation3 + $0x4] sm:$0x3] %vm271, 0
        %v275 = vld [vmem:[%s239] sm:$0x3f]
        %277 = vrot.lane.b32.xlu0 %v275, 19
        %v278 = vpop.permute.xlu0 %277
        %v279 = vrot.slane %v278, 6
        %vm280 = vcmask 154624
        %v281 = vsel %vm280, %v279, %v278
        %vm283 = vcmask 1041560
        %vm284 = vcmask 1043458
        %vm285 = vmor %vm284, %vm283
        %vm286 = vcmask 414724
        %vm287 = vmor %vm286, %vm285
        %288 = vst.msk [vmem:[#allocation2] sm:$0x3f] %vm287, %v281
        %v289 = vld [vmem:[%s5] sm:$0x7]
        %v290 = vld [vmem:[#allocation2] sm:$0x3f]
        %v292 = vcombine.high %v290, %v290
        %v294 = vunpack.c.l.s4 1983009808
        %v295 = vunpack.c.0.s8 %v294
        %v296 = vlaneseq
        %v297 = vshrl.u32 %v296, 7
        %v298 = vsub.s32 %v295, %v297
        %v299 = vrot.slane %v290, %v298
        %v301 = vunpack.c.l.s4 1983009808
        %v302 = vunpack.c.0.s8 %v301
        %v303 = vlaneseq
        %v304 = vshrl.u32 %v303, 7
        %v305 = vsub.s32 %v302, %v304
        %v306 = vrot.slane %v292, %v305
        %309 = vst [vmem:[#allocation4] sm:$0x33] %v299
        %vm310 = vcmask 254976
        %311 = vst.msk [vmem:[#allocation4 + $0x8] sm:$0x3] %vm310, %v306
        %v312 = vld [vmem:[#allocation2] sm:$0x3f]
        %v314 = vcombine.low %v312, %v312
        %v316 = vunpack.c.l.s4 1983009808
        %v317 = vunpack.c.0.s8 %v316
        %v318 = vlaneseq
        %v319 = vshrl.u32 %v318, 7
        %v320 = vsub.s32 %v317, %v319
        %v321 = vrot.slane %v314, %v320
        %v323 = vunpack.c.l.s4 1983009808
        %v324 = vunpack.c.0.s8 %v323
        %v325 = vlaneseq
        %v326 = vshrl.u32 %v325, 7
        %v327 = vsub.s32 %v324, %v326
        %v328 = vrot.slane %v312, %v327
        %329 = vrot.lane.b32.xlu0 %v321, 127
        %v330 = vpop.permute.xlu0 %329
        %331 = vrot.lane.b32.xlu0 %v328, 127
        %v332 = vpop.permute.xlu0 %331
        %v333 = vrot.slane %v330, 4
        %v334 = vrot.slane %v332, 4
        %vm335 = vcmask 1043456
        %v336 = vsel %vm335, %v333, %v334
        %vm337 = vcmask 1039360
        %v338 = vsel %vm337, %v330, %v336
        %341 = vst [vmem:[#allocation4] sm:$0xcc] %v338
        %vm342 = vcmask 257026
        %343 = vst.msk [vmem:[#allocation4 + $0x8] sm:$0xc] %vm342, %v332
        %v344 = vld [vmem:[#allocation2] sm:$0x3f]
        %v346 = vcombine.high %v344, %v344
        %v348 = vunpack.c.l.s4 1983009808
        %v349 = vunpack.c.0.s8 %v348
        %v350 = vlaneseq
        %v351 = vshrl.u32 %v350, 7
        %v352 = vsub.s32 %v349, %v351
        %v353 = vrot.slane %v344, %v352
        %v355 = vunpack.c.l.s4 1983009808
        %v356 = vunpack.c.0.s8 %v355
        %v357 = vlaneseq
        %v358 = vshrl.u32 %v357, 7
        %v359 = vsub.s32 %v356, %v358
        %v360 = vrot.slane %v346, %v359
        %361 = vrot.lane.b32.xlu0 %v353, 126
        %v362 = vpop.permute.xlu0 %361
        %363 = vrot.lane.b32.xlu0 %v360, 126
        %v364 = vpop.permute.xlu0 %363
        %v365 = vrot.slane %v362, 4
        %v366 = vrot.slane %v364, 4
        %v367 = vsel %vm335, %v365, %v366
        %vm368 = vcmask 1031168
        %v369 = vsel %vm368, %v362, %v367
        %372 = vst [vmem:[#allocation4 + $0xc] sm:$0x33] %v369
        %373 = vst.msk [vmem:[#allocation4 + $0x14] sm:$0x3] %vm310, %v364
        %v374 = vld [vmem:[#allocation2] sm:$0x3f]
        %v376 = vcombine.low %v374, %v374
        %v378 = vunpack.c.l.s4 1983009808
        %v379 = vunpack.c.0.s8 %v378
        %v380 = vlaneseq
        %v381 = vshrl.u32 %v380, 7
        %v382 = vsub.s32 %v379, %v381
        %v383 = vrot.slane %v376, %v382
        %v385 = vunpack.c.l.s4 1983009808
        %v386 = vunpack.c.0.s8 %v385
        %v387 = vlaneseq
        %v388 = vshrl.u32 %v387, 7
        %v389 = vsub.s32 %v386, %v388
        %v390 = vrot.slane %v374, %v389
        %391 = vrot.lane.b32.xlu0 %v383, 110
        %v392 = vpop.permute.xlu0 %391
        %393 = vrot.lane.b32.xlu0 %v390, 110
        %v394 = vpop.permute.xlu0 %393
        %v395 = vrot.slane %v392, 4
        %v396 = vrot.slane %v394, 4
        %v397 = vsel %vm335, %v395, %v396
        %vm398 = vcmask 900096
        %v399 = vsel %vm398, %v392, %v397
        %402 = vst [vmem:[#allocation4 + $0xc] sm:$0xcc] %v399
        %403 = vst.msk [vmem:[#allocation4 + $0x14] sm:$0xc] %vm342, %v394
        %v404 = vld [vmem:[#allocation2] sm:$0x3f]
        %v406 = vcombine.high %v404, %v404
        %v408 = vunpack.c.l.s4 1983009808
        %v409 = vunpack.c.0.s8 %v408
        %v410 = vlaneseq
        %v411 = vshrl.u32 %v410, 7
        %v412 = vsub.s32 %v409, %v411
        %v413 = vrot.slane %v404, %v412
        %v415 = vunpack.c.l.s4 1983009808
        %v416 = vunpack.c.0.s8 %v415
        %v417 = vlaneseq
        %v418 = vshrl.u32 %v417, 7
        %v419 = vsub.s32 %v416, %v418
        %v420 = vrot.slane %v406, %v419
        %421 = vrot.lane.b32.xlu0 %v413, 109
        %v422 = vpop.permute.xlu0 %421
        %423 = vrot.lane.b32.xlu0 %v420, 109
        %v424 = vpop.permute.xlu0 %423
        %v425 = vrot.slane %v422, 4
        %v426 = vrot.slane %v424, 4
        %v427 = vsel %vm335, %v425, %v426
        %vm428 = vcmask 891904
        %v429 = vsel %vm428, %v422, %v427
        %432 = vst [vmem:[#allocation4 + $0x18] sm:$0x33] %v429
        %433 = vst.msk [vmem:[#allocation4 + $0x20] sm:$0x3] %vm310, %v424
        %v434 = vld [vmem:[#allocation2] sm:$0x3f]
        %v436 = vcombine.low %v434, %v434
        %v438 = vunpack.c.l.s4 1983009808
        %v439 = vunpack.c.0.s8 %v438
        %v440 = vlaneseq
        %v441 = vshrl.u32 %v440, 7
        %v442 = vsub.s32 %v439, %v441
        %v443 = vrot.slane %v436, %v442
        %v445 = vunpack.c.l.s4 1983009808
        %v446 = vunpack.c.0.s8 %v445
        %v447 = vlaneseq
        %v448 = vshrl.u32 %v447, 7
        %v449 = vsub.s32 %v446, %v448
        %v450 = vrot.slane %v434, %v449
        %451 = vrot.lane.b32.xlu0 %v443, 108
        %v452 = vpop.permute.xlu0 %451
        %453 = vrot.lane.b32.xlu0 %v450, 108
        %v454 = vpop.permute.xlu0 %453
        %v455 = vrot.slane %v452, 4
        %v456 = vrot.slane %v454, 4
        %v457 = vsel %vm335, %v455, %v456
        %vm458 = vcmask 883712
        %v459 = vsel %vm458, %v452, %v457
        %462 = vst [vmem:[#allocation4 + $0x18] sm:$0xcc] %v459
        %463 = vst.msk [vmem:[#allocation4 + $0x20] sm:$0xc] %vm342, %v454
        %v464 = vld [vmem:[#allocation2] sm:$0x3f]
        %v466 = vcombine.high %v464, %v464
        %v468 = vunpack.c.l.s4 1983009808
        %v469 = vunpack.c.0.s8 %v468
        %v470 = vlaneseq
        %v471 = vshrl.u32 %v470, 7
        %v472 = vsub.s32 %v469, %v471
        %v473 = vrot.slane %v464, %v472
        %v475 = vunpack.c.l.s4 1983009808
        %v476 = vunpack.c.0.s8 %v475
        %v477 = vlaneseq
        %v478 = vshrl.u32 %v477, 7
        %v479 = vsub.s32 %v476, %v478
        %v480 = vrot.slane %v466, %v479
        %481 = vrot.lane.b32.xlu0 %v473, 92
        %v482 = vpop.permute.xlu0 %481
        %483 = vrot.lane.b32.xlu0 %v480, 92
        %v484 = vpop.permute.xlu0 %483
        %v485 = vrot.slane %v482, 4
        %v486 = vrot.slane %v484, 4
        %v487 = vsel %vm335, %v485, %v486
        %vm488 = vcmask 752640
        %v489 = vsel %vm488, %v482, %v487
        %492 = vst [vmem:[#allocation4 + $0x24] sm:$0x33] %v489
        %493 = vst.msk [vmem:[#allocation4 + $0x2c] sm:$0x3] %vm310, %v484
        %v494 = vld [vmem:[#allocation2] sm:$0x3f]
        %v496 = vcombine.low %v494, %v494
        %v498 = vunpack.c.l.s4 1983009808
        %v499 = vunpack.c.0.s8 %v498
        %v500 = vlaneseq
        %v501 = vshrl.u32 %v500, 7
        %v502 = vsub.s32 %v499, %v501
        %v503 = vrot.slane %v496, %v502
        %v505 = vunpack.c.l.s4 1983009808
        %v506 = vunpack.c.0.s8 %v505
        %v507 = vlaneseq
        %v508 = vshrl.u32 %v507, 7
        %v509 = vsub.s32 %v506, %v508
        %v510 = vrot.slane %v494, %v509
        %511 = vrot.lane.b32.xlu0 %v503, 91
        %v512 = vpop.permute.xlu0 %511
        %513 = vrot.lane.b32.xlu0 %v510, 91
        %v514 = vpop.permute.xlu0 %513
        %v515 = vrot.slane %v512, 4
        %v516 = vrot.slane %v514, 4
        %v517 = vsel %vm335, %v515, %v516
        %vm518 = vcmask 744448
        %v519 = vsel %vm518, %v512, %v517
        %522 = vst [vmem:[#allocation4 + $0x24] sm:$0xcc] %v519
        %523 = vst.msk [vmem:[#allocation4 + $0x2c] sm:$0xc] %vm342, %v514
        %v524 = vld [vmem:[#allocation2] sm:$0x3f]
        %v526 = vcombine.high %v524, %v524
        %v528 = vunpack.c.l.s4 1983009808
        %v529 = vunpack.c.0.s8 %v528
        %v530 = vlaneseq
        %v531 = vshrl.u32 %v530, 7
        %v532 = vsub.s32 %v529, %v531
        %v533 = vrot.slane %v524, %v532
        %v535 = vunpack.c.l.s4 1983009808
        %v536 = vunpack.c.0.s8 %v535
        %v537 = vlaneseq
        %v538 = vshrl.u32 %v537, 7
        %v539 = vsub.s32 %v536, %v538
        %v540 = vrot.slane %v526, %v539
        %541 = vrot.lane.b32.xlu0 %v533, 90
        %v542 = vpop.permute.xlu0 %541
        %543 = vrot.lane.b32.xlu0 %v540, 90
        %v544 = vpop.permute.xlu0 %543
        %v545 = vrot.slane %v542, 4
        %v546 = vrot.slane %v544, 4
        %v547 = vsel %vm335, %v545, %v546
        %vm548 = vcmask 736256
        %v549 = vsel %vm548, %v542, %v547
        %552 = vst [vmem:[#allocation4 + $0x30] sm:$0x33] %v549
        %553 = vst.msk [vmem:[#allocation4 + $0x38] sm:$0x3] %vm310, %v544
        %v554 = vld [vmem:[%s1] sm:$0x3]
        %v555 = vld [vmem:[#allocation4] sm:$0xff]
        %v556 = vld [vmem:[#allocation4 + $0x8] sm:$0xf]
        %v557 = vld [vmem:[#allocation4 + $0xc] sm:$0xff]
        %v558 = vld [vmem:[#allocation4 + $0x14] sm:$0xf]
        %v559 = vld [vmem:[#allocation4 + $0x18] sm:$0xff]
        %v560 = vld [vmem:[#allocation4 + $0x20] sm:$0xf]
        %v561 = vld [vmem:[#allocation4 + $0x24] sm:$0xff]
        %v562 = vld [vmem:[#allocation4 + $0x2c] sm:$0xf]
        %v563 = vld [vmem:[#allocation4 + $0x30] sm:$0x33]
        %v564 = vld [vmem:[#allocation4 + $0x38] sm:$0x3]
        %v565 = vld [vmem:[%s2] sm:$0xf]
        %567 = vset.pattern.permute.xlu0 0
        %568 = vperm.xlu0 %567, %v565
        %v569 = vpop.permute.xlu0 %568
        %v581 = vunpack.c.l.b16 %v555
        %v582 = vunpack.c.h.b16 %v555
        %v583 = vunpack.c.l.b16 %v556
        %v584 = vunpack.c.l.b16 %v557
        %v585 = vunpack.c.h.b16 %v557
        %v586 = vunpack.c.l.b16 %v558
        %v587 = vunpack.c.l.b16 %v559
        %v588 = vunpack.c.h.b16 %v559
        %v589 = vunpack.c.l.b16 %v560
        %v590 = vunpack.c.l.b16 %v561
        %v591 = vunpack.c.h.b16 %v561
        %v592 = vunpack.c.l.b16 %v562
        %v593 = vunpack.c.l.b16 %v563
        %v594 = vunpack.c.h.b16 %v563
        %v595 = vunpack.c.l.b16 %v564
        %v596 = vpack.c.b16 %v584, %v581
        %v597 = vpack.c.b16 %v585, %v582
        %v598 = vpack.c.b16 %v586, %v583
        %v599 = vpack.c.b16 %v590, %v587
        %v600 = vpack.c.b16 %v591, %v588
        %v601 = vpack.c.b16 %v592, %v589
        %v602 = vpack.c.b16 %v593, %v593
        %v603 = vpack.c.b16 %v594, %v594
        %v604 = vpack.c.b16 %v595, %v595
        %vm611 = vcmask 293888
        %v613 = vsel %vm611, %v554, 0
        %vm615 = vcmask 1041408
        %v617 = vsel %vm615, %v602, 0
        %v620 = vsel %vm615, %v603, 0
        %v623 = vsel %vm615, %v604, 0
        %625 = vmatprep.subr.bf16.mxu0 %v597
        %626 = vmatpush1.bf16.msra.mxu0 %v596
        %627 = vmatprep.subr.bf16.mxu0 %v600
        %628 = vmatpush1.bf16.msra.mxu0 %v599
        %629 = vmatprep.subr.bf16.mxu0 %v620
        %630 = vmatpush1.bf16.msra.mxu0 %v617
        %631 = vmatprep.subr.bf16.mxu0 0
        %632 = vmatpush1.bf16.msra.mxu0 0
        %633 = vmatprep.subr.bf16.mxu0 0
        %634 = vmatpush1.bf16.msra.mxu0 0
        %635 = vmatprep.subr.bf16.mxu0 0
        %636 = vmatpush1.bf16.msra.mxu0 0
        %637 = vmatprep.subr.bf16.mxu0 0
        %638 = vmatpush1.bf16.msra.mxu0 0
        %639 = vmatprep.subr.bf16.mxu0 0
        %640 = vmatpush1.bf16.msra.mxu0 0
        %641 = vmatprep.subr.bf16.mxu0 0
        %642 = vmatpush1.bf16.msra.mxu0 0
        %643 = vmatprep.subr.bf16.mxu0 0
        %644 = vmatpush1.bf16.msra.mxu0 0
        %645 = vmatprep.subr.bf16.mxu0 0
        %646 = vmatpush1.bf16.msra.mxu0 0
        %647 = vmatprep.subr.bf16.mxu0 0
        %648 = vmatpush1.bf16.msra.mxu0 0
        %649 = vmatprep.subr.bf16.mxu0 0
        %650 = vmatpush1.bf16.msra.mxu0 0
        %651 = vmatprep.subr.bf16.mxu0 0
        %652 = vmatpush1.bf16.msra.mxu0 0
        %653 = vmatprep.subr.bf16.mxu0 0
        %654 = vmatpush1.bf16.msra.mxu0 0
        %655 = vmatprep.subr.bf16.mxu0 0
        %656 = vmatpush1.bf16.msra.mxu0 0
        %657 = vmatprep.mubr.bf16.mxu0 0
        %658 = vmatmul.mubr.bf16.gmra.mrb[0].mxu0 %v613
        %v659 = vpop.f32.mrb[0].mxu0
        %v660 = vadd.f32 %v569, %v659
        %v661 = vpop.f32.mrb[0].mxu0
        %v662 = vadd.f32 %v569, %v661
        %v663 = vpop.f32.mrb[0].mxu0
        %v664 = vpop.f32.mrb[0].mxu0
        %665 = vdwg.mxu0
        %666 = vmatprep.subr.bf16.mxu0 0
        %667 = vmatpush1.bf16.msra.mxu0 %v598
        %668 = vmatprep.subr.bf16.mxu0 0
        %669 = vmatpush1.bf16.msra.mxu0 %v601
        %670 = vmatprep.subr.bf16.mxu0 0
        %671 = vmatpush1.bf16.msra.mxu0 %v623
        %672 = vmatprep.subr.bf16.mxu0 0
        %673 = vmatpush1.bf16.msra.mxu0 0
        %674 = vmatprep.subr.bf16.mxu0 0
        %675 = vmatpush1.bf16.msra.mxu0 0
        %676 = vmatprep.subr.bf16.mxu0 0
        %677 = vmatpush1.bf16.msra.mxu0 0
        %678 = vmatprep.subr.bf16.mxu0 0
        %679 = vmatpush1.bf16.msra.mxu0 0
        %680 = vmatprep.subr.bf16.mxu0 0
        %681 = vmatpush1.bf16.msra.mxu0 0
        %682 = vmatprep.subr.bf16.mxu0 0
        %683 = vmatpush1.bf16.msra.mxu0 0
        %684 = vmatprep.subr.bf16.mxu0 0
        %685 = vmatpush1.bf16.msra.mxu0 0
        %686 = vmatprep.subr.bf16.mxu0 0
        %687 = vmatpush1.bf16.msra.mxu0 0
        %688 = vmatprep.subr.bf16.mxu0 0
        %689 = vmatpush1.bf16.msra.mxu0 0
        %690 = vmatprep.subr.bf16.mxu0 0
        %691 = vmatpush1.bf16.msra.mxu0 0
        %692 = vmatprep.subr.bf16.mxu0 0
        %693 = vmatpush1.bf16.msra.mxu0 0
        %694 = vmatprep.subr.bf16.mxu0 0
        %695 = vmatpush1.bf16.msra.mxu0 0
        %696 = vmatprep.subr.bf16.mxu0 0
        %697 = vmatpush1.bf16.msra.mxu0 0
        %698 = vmatprep.mubr.bf16.mxu0 0
        %699 = vmatmul.mubr.bf16.gmra.mrb[0].mxu0 %v613
        %v700 = vpop.f32.mrb[0].mxu0
        %v701 = vadd.f32 %v569, %v700
        %v702 = vpop.f32.mrb[0].mxu0
        %v703 = vpop.f32.mrb[0].mxu0
        %v704 = vpop.f32.mrb[0].mxu0
        %705 = vdwg.mxu0
        %v706 = vmax.f32 %v660, 0.0
        %v707 = vmax.f32 %v662, 0.0
        %v708 = vmax.f32 %v701, 0.0
        %v710 = vlaneseq
        %v711 = vshrl.u32 %v710, 7
        %v712 = vsub.s32 0, %v711
        %v713 = vrot.slane %v289, %v712
        %v714 = vlaneseq
        %v715 = vshrl.u32 %v714, 7
        %v716 = vsub.s32 1, %v715
        %v717 = vrot.slane %v289, %v716
        %v718 = vlaneseq
        %v719 = vshrl.u32 %v718, 7
        %v720 = vsub.s32 2, %v719
        %v721 = vrot.slane %v289, %v720
        %v725 = vmul.f32 %v706, %v713
        %v726 = vmul.f32 %v707, %v717
        %v727 = vmul.f32 %v708, %v721
        %v728 = vpack.c.bf16 %v725, %v725
        %v729 = vpack.c.bf16 %v726, %v726
        %v730 = vpack.c.bf16 %v727, %v727
        %v734 = vcombine.low %v728, %v729
        %v736 = vunpack.c.l.s4 1983009808
        %v737 = vunpack.c.0.s8 %v736
        %v738 = vlaneseq
        %v739 = vshrl.u32 %v738, 7
        %v740 = vsub.s32 %v737, %v739
        %v741 = vrot.slane %v734, %v740
        %v743 = vunpack.c.l.s4 1983009808
        %v744 = vunpack.c.0.s8 %v743
        %v745 = vlaneseq
        %v746 = vshrl.u32 %v745, 7
        %v747 = vsub.s32 %v744, %v746
        %v748 = vrot.slane %v730, %v747
        %v749 = vcombine.low %v741, %v748
        %750 = vrot.lane.b32.xlu0 %v749, 19
        %v751 = vpop.permute.xlu0 %750
        %v752 = vrot.slane %v751, 6
        %v753 = vsel %vm280, %v752, %v751
        %755 = vst.msk [vmem:[#allocation3] sm:$0x3f] %vm287, %v753
        %v756 = vld [vmem:[#allocation3] sm:$0x3f]
        %v758 = vcombine.high %v756, %v756
        %v760 = vunpack.c.l.s4 1983009808
        %v761 = vunpack.c.0.s8 %v760
        %v762 = vlaneseq
        %v763 = vshrl.u32 %v762, 7
        %v764 = vsub.s32 %v761, %v763
        %v765 = vrot.slane %v756, %v764
        %v767 = vunpack.c.l.s4 1983009808
        %v768 = vunpack.c.0.s8 %v767
        %v769 = vlaneseq
        %v770 = vshrl.u32 %v769, 7
        %v771 = vsub.s32 %v768, %v770
        %v772 = vrot.slane %v758, %v771
        %775 = vst [vmem:[#allocation4] sm:$0x33] %v765
        %776 = vst.msk [vmem:[#allocation4 + $0x8] sm:$0x3] %vm310, %v772
        %v777 = vld [vmem:[#allocation3] sm:$0x3f]
        %v779 = vcombine.low %v777, %v777
        %v781 = vunpack.c.l.s4 1983009808
        %v782 = vunpack.c.0.s8 %v781
        %v783 = vlaneseq
        %v784 = vshrl.u32 %v783, 7
        %v785 = vsub.s32 %v782, %v784
        %v786 = vrot.slane %v779, %v785
        %v788 = vunpack.c.l.s4 1983009808
        %v789 = vunpack.c.0.s8 %v788
        %v790 = vlaneseq
        %v791 = vshrl.u32 %v790, 7
        %v792 = vsub.s32 %v789, %v791
        %v793 = vrot.slane %v777, %v792
        %794 = vrot.lane.b32.xlu0 %v786, 127
        %v795 = vpop.permute.xlu0 %794
        %796 = vrot.lane.b32.xlu0 %v793, 127
        %v797 = vpop.permute.xlu0 %796
        %v798 = vrot.slane %v795, 4
        %v799 = vrot.slane %v797, 4
        %v800 = vsel %vm335, %v798, %v799
        %v801 = vsel %vm337, %v795, %v800
        %804 = vst [vmem:[#allocation4] sm:$0xcc] %v801
        %805 = vst.msk [vmem:[#allocation4 + $0x8] sm:$0xc] %vm342, %v797
        %v806 = vld [vmem:[#allocation3] sm:$0x3f]
        %v808 = vcombine.high %v806, %v806
        %v810 = vunpack.c.l.s4 1983009808
        %v811 = vunpack.c.0.s8 %v810
        %v812 = vlaneseq
        %v813 = vshrl.u32 %v812, 7
        %v814 = vsub.s32 %v811, %v813
        %v815 = vrot.slane %v806, %v814
        %v817 = vunpack.c.l.s4 1983009808
        %v818 = vunpack.c.0.s8 %v817
        %v819 = vlaneseq
        %v820 = vshrl.u32 %v819, 7
        %v821 = vsub.s32 %v818, %v820
        %v822 = vrot.slane %v808, %v821
        %823 = vrot.lane.b32.xlu0 %v815, 126
        %v824 = vpop.permute.xlu0 %823
        %825 = vrot.lane.b32.xlu0 %v822, 126
        %v826 = vpop.permute.xlu0 %825
        %v827 = vrot.slane %v824, 4
        %v828 = vrot.slane %v826, 4
        %v829 = vsel %vm335, %v827, %v828
        %v830 = vsel %vm368, %v824, %v829
        %833 = vst [vmem:[#allocation4 + $0xc] sm:$0x33] %v830
        %834 = vst.msk [vmem:[#allocation4 + $0x14] sm:$0x3] %vm310, %v826
        %v835 = vld [vmem:[#allocation3] sm:$0x3f]
        %v837 = vcombine.low %v835, %v835
        %v839 = vunpack.c.l.s4 1983009808
        %v840 = vunpack.c.0.s8 %v839
        %v841 = vlaneseq
        %v842 = vshrl.u32 %v841, 7
        %v843 = vsub.s32 %v840, %v842
        %v844 = vrot.slane %v837, %v843
        %v846 = vunpack.c.l.s4 1983009808
        %v847 = vunpack.c.0.s8 %v846
        %v848 = vlaneseq
        %v849 = vshrl.u32 %v848, 7
        %v850 = vsub.s32 %v847, %v849
        %v851 = vrot.slane %v835, %v850
        %852 = vrot.lane.b32.xlu0 %v844, 110
        %v853 = vpop.permute.xlu0 %852
        %854 = vrot.lane.b32.xlu0 %v851, 110
        %v855 = vpop.permute.xlu0 %854
        %v856 = vrot.slane %v853, 4
        %v857 = vrot.slane %v855, 4
        %v858 = vsel %vm335, %v856, %v857
        %v859 = vsel %vm398, %v853, %v858
        %862 = vst [vmem:[#allocation4 + $0xc] sm:$0xcc] %v859
        %863 = vst.msk [vmem:[#allocation4 + $0x14] sm:$0xc] %vm342, %v855
        %v864 = vld [vmem:[#allocation3] sm:$0x3f]
        %v866 = vcombine.high %v864, %v864
        %v868 = vunpack.c.l.s4 1983009808
        %v869 = vunpack.c.0.s8 %v868
        %v870 = vlaneseq
        %v871 = vshrl.u32 %v870, 7
        %v872 = vsub.s32 %v869, %v871
        %v873 = vrot.slane %v864, %v872
        %v875 = vunpack.c.l.s4 1983009808
        %v876 = vunpack.c.0.s8 %v875
        %v877 = vlaneseq
        %v878 = vshrl.u32 %v877, 7
        %v879 = vsub.s32 %v876, %v878
        %v880 = vrot.slane %v866, %v879
        %881 = vrot.lane.b32.xlu0 %v873, 109
        %v882 = vpop.permute.xlu0 %881
        %883 = vrot.lane.b32.xlu0 %v880, 109
        %v884 = vpop.permute.xlu0 %883
        %v885 = vrot.slane %v882, 4
        %v886 = vrot.slane %v884, 4
        %v887 = vsel %vm335, %v885, %v886
        %v888 = vsel %vm428, %v882, %v887
        %891 = vst [vmem:[#allocation4 + $0x18] sm:$0x33] %v888
        %892 = vst.msk [vmem:[#allocation4 + $0x20] sm:$0x3] %vm310, %v884
        %v893 = vld [vmem:[#allocation3] sm:$0x3f]
        %v895 = vcombine.low %v893, %v893
        %v897 = vunpack.c.l.s4 1983009808
        %v898 = vunpack.c.0.s8 %v897
        %v899 = vlaneseq
        %v900 = vshrl.u32 %v899, 7
        %v901 = vsub.s32 %v898, %v900
        %v902 = vrot.slane %v895, %v901
        %v904 = vunpack.c.l.s4 1983009808
        %v905 = vunpack.c.0.s8 %v904
        %v906 = vlaneseq
        %v907 = vshrl.u32 %v906, 7
        %v908 = vsub.s32 %v905, %v907
        %v909 = vrot.slane %v893, %v908
        %910 = vrot.lane.b32.xlu0 %v902, 108
        %v911 = vpop.permute.xlu0 %910
        %912 = vrot.lane.b32.xlu0 %v909, 108
        %v913 = vpop.permute.xlu0 %912
        %v914 = vrot.slane %v911, 4
        %v915 = vrot.slane %v913, 4
        %v916 = vsel %vm335, %v914, %v915
        %v917 = vsel %vm458, %v911, %v916
        %920 = vst [vmem:[#allocation4 + $0x18] sm:$0xcc] %v917
        %921 = vst.msk [vmem:[#allocation4 + $0x20] sm:$0xc] %vm342, %v913
        %v922 = vld [vmem:[#allocation3] sm:$0x3f]
        %v924 = vcombine.high %v922, %v922
        %v926 = vunpack.c.l.s4 1983009808
        %v927 = vunpack.c.0.s8 %v926
        %v928 = vlaneseq
        %v929 = vshrl.u32 %v928, 7
        %v930 = vsub.s32 %v927, %v929
        %v931 = vrot.slane %v922, %v930
        %v933 = vunpack.c.l.s4 1983009808
        %v934 = vunpack.c.0.s8 %v933
        %v935 = vlaneseq
        %v936 = vshrl.u32 %v935, 7
        %v937 = vsub.s32 %v934, %v936
        %v938 = vrot.slane %v924, %v937
        %939 = vrot.lane.b32.xlu0 %v931, 92
        %v940 = vpop.permute.xlu0 %939
        %941 = vrot.lane.b32.xlu0 %v938, 92
        %v942 = vpop.permute.xlu0 %941
        %v943 = vrot.slane %v940, 4
        %v944 = vrot.slane %v942, 4
        %v945 = vsel %vm335, %v943, %v944
        %v946 = vsel %vm488, %v940, %v945
        %949 = vst [vmem:[#allocation4 + $0x24] sm:$0x33] %v946
        %950 = vst.msk [vmem:[#allocation4 + $0x2c] sm:$0x3] %vm310, %v942
        %v951 = vld [vmem:[#allocation3] sm:$0x3f]
        %v953 = vcombine.low %v951, %v951
        %v955 = vunpack.c.l.s4 1983009808
        %v956 = vunpack.c.0.s8 %v955
        %v957 = vlaneseq
        %v958 = vshrl.u32 %v957, 7
        %v959 = vsub.s32 %v956, %v958
        %v960 = vrot.slane %v953, %v959
        %v962 = vunpack.c.l.s4 1983009808
        %v963 = vunpack.c.0.s8 %v962
        %v964 = vlaneseq
        %v965 = vshrl.u32 %v964, 7
        %v966 = vsub.s32 %v963, %v965
        %v967 = vrot.slane %v951, %v966
        %968 = vrot.lane.b32.xlu0 %v960, 91
        %v969 = vpop.permute.xlu0 %968
        %970 = vrot.lane.b32.xlu0 %v967, 91
        %v971 = vpop.permute.xlu0 %970
        %v972 = vrot.slane %v969, 4
        %v973 = vrot.slane %v971, 4
        %v974 = vsel %vm335, %v972, %v973
        %v975 = vsel %vm518, %v969, %v974
        %978 = vst [vmem:[#allocation4 + $0x24] sm:$0xcc] %v975
        %979 = vst.msk [vmem:[#allocation4 + $0x2c] sm:$0xc] %vm342, %v971
        %v980 = vld [vmem:[#allocation3] sm:$0x3f]
        %v982 = vcombine.high %v980, %v980
        %v984 = vunpack.c.l.s4 1983009808
        %v985 = vunpack.c.0.s8 %v984
        %v986 = vlaneseq
        %v987 = vshrl.u32 %v986, 7
        %v988 = vsub.s32 %v985, %v987
        %v989 = vrot.slane %v980, %v988
        %v991 = vunpack.c.l.s4 1983009808
        %v992 = vunpack.c.0.s8 %v991
        %v993 = vlaneseq
        %v994 = vshrl.u32 %v993, 7
        %v995 = vsub.s32 %v992, %v994
        %v996 = vrot.slane %v982, %v995
        %997 = vrot.lane.b32.xlu0 %v989, 90
        %v998 = vpop.permute.xlu0 %997
        %999 = vrot.lane.b32.xlu0 %v996, 90
        %v1000 = vpop.permute.xlu0 %999
        %v1001 = vrot.slane %v998, 4
        %v1002 = vrot.slane %v1000, 4
        %v1003 = vsel %vm335, %v1001, %v1002
        %v1004 = vsel %vm548, %v998, %v1003
        %1007 = vst [vmem:[#allocation4 + $0x30] sm:$0x33] %v1004
        %1008 = vst.msk [vmem:[#allocation4 + $0x38] sm:$0x3] %vm310, %v1000
        %v1009 = vld [vmem:[%s3] sm:$0x3]
        %v1010 = vld [vmem:[#allocation4] sm:$0xff]
        %v1011 = vld [vmem:[#allocation4 + $0x8] sm:$0xf]
        %v1012 = vld [vmem:[#allocation4 + $0xc] sm:$0xff]
        %v1013 = vld [vmem:[#allocation4 + $0x14] sm:$0xf]
        %v1014 = vld [vmem:[#allocation4 + $0x18] sm:$0xff]
        %v1015 = vld [vmem:[#allocation4 + $0x20] sm:$0xf]
        %v1016 = vld [vmem:[#allocation4 + $0x24] sm:$0xff]
        %v1017 = vld [vmem:[#allocation4 + $0x2c] sm:$0xf]
        %v1018 = vld [vmem:[#allocation4 + $0x30] sm:$0x33]
        %v1019 = vld [vmem:[#allocation4 + $0x38] sm:$0x3]
        %v1020 = vld [vmem:[%s4] sm:$0xf]
        %1022 = vset.pattern.permute.xlu0 0
        %1023 = vperm.xlu0 %1022, %v1020
        %v1024 = vpop.permute.xlu0 %1023
        %v1036 = vunpack.c.l.b16 %v1010
        %v1037 = vunpack.c.h.b16 %v1010
        %v1038 = vunpack.c.l.b16 %v1011
        %v1039 = vunpack.c.l.b16 %v1012
        %v1040 = vunpack.c.h.b16 %v1012
        %v1041 = vunpack.c.l.b16 %v1013
        %v1042 = vunpack.c.l.b16 %v1014
        %v1043 = vunpack.c.h.b16 %v1014
        %v1044 = vunpack.c.l.b16 %v1015
        %v1045 = vunpack.c.l.b16 %v1016
        %v1046 = vunpack.c.h.b16 %v1016
        %v1047 = vunpack.c.l.b16 %v1017
        %v1048 = vunpack.c.l.b16 %v1018
        %v1049 = vunpack.c.h.b16 %v1018
        %v1050 = vunpack.c.l.b16 %v1019
        %v1051 = vpack.c.b16 %v1039, %v1036
        %v1052 = vpack.c.b16 %v1040, %v1037
        %v1053 = vpack.c.b16 %v1041, %v1038
        %v1054 = vpack.c.b16 %v1045, %v1042
        %v1055 = vpack.c.b16 %v1046, %v1043
        %v1056 = vpack.c.b16 %v1047, %v1044
        %v1057 = vpack.c.b16 %v1048, %v1048
        %v1058 = vpack.c.b16 %v1049, %v1049
        %v1059 = vpack.c.b16 %v1050, %v1050
        %v1067 = vsel %vm611, %v1009, 0
        %v1070 = vsel %vm615, %v1057, 0
        %v1073 = vsel %vm615, %v1058, 0
        %v1076 = vsel %vm615, %v1059, 0
        %1078 = vmatprep.subr.bf16.mxu0 %v1052
        %1079 = vmatpush1.bf16.msra.mxu0 %v1051
        %1080 = vmatprep.subr.bf16.mxu0 %v1055
        %1081 = vmatpush1.bf16.msra.mxu0 %v1054
        %1082 = vmatprep.subr.bf16.mxu0 %v1073
        %1083 = vmatpush1.bf16.msra.mxu0 %v1070
        %1084 = vmatprep.subr.bf16.mxu0 0
        %1085 = vmatpush1.bf16.msra.mxu0 0
        %1086 = vmatprep.subr.bf16.mxu0 0
        %1087 = vmatpush1.bf16.msra.mxu0 0
        %1088 = vmatprep.subr.bf16.mxu0 0
        %1089 = vmatpush1.bf16.msra.mxu0 0
        %1090 = vmatprep.subr.bf16.mxu0 0
        %1091 = vmatpush1.bf16.msra.mxu0 0
        %1092 = vmatprep.subr.bf16.mxu0 0
        %1093 = vmatpush1.bf16.msra.mxu0 0
        %1094 = vmatprep.subr.bf16.mxu0 0
        %1095 = vmatpush1.bf16.msra.mxu0 0
        %1096 = vmatprep.subr.bf16.mxu0 0
        %1097 = vmatpush1.bf16.msra.mxu0 0
        %1098 = vmatprep.subr.bf16.mxu0 0
        %1099 = vmatpush1.bf16.msra.mxu0 0
        %1100 = vmatprep.subr.bf16.mxu0 0
        %1101 = vmatpush1.bf16.msra.mxu0 0
        %1102 = vmatprep.subr.bf16.mxu0 0
        %1103 = vmatpush1.bf16.msra.mxu0 0
        %1104 = vmatprep.subr.bf16.mxu0 0
        %1105 = vmatpush1.bf16.msra.mxu0 0
        %1106 = vmatprep.subr.bf16.mxu0 0
        %1107 = vmatpush1.bf16.msra.mxu0 0
        %1108 = vmatprep.subr.bf16.mxu0 0
        %1109 = vmatpush1.bf16.msra.mxu0 0
        %1110 = vmatprep.mubr.bf16.mxu0 0
        %1111 = vmatmul.mubr.bf16.gmra.mrb[0].mxu0 %v1067
        %v1112 = vpop.f32.mrb[0].mxu0
        %v1113 = vadd.f32 %v1024, %v1112
        %v1114 = vpop.f32.mrb[0].mxu0
        %v1115 = vadd.f32 %v1024, %v1114
        %v1116 = vpop.f32.mrb[0].mxu0
        %v1117 = vpop.f32.mrb[0].mxu0
        %1118 = vdwg.mxu0
        %1119 = vmatprep.subr.bf16.mxu0 0
        %1120 = vmatpush1.bf16.msra.mxu0 %v1053
        %1121 = vmatprep.subr.bf16.mxu0 0
        %1122 = vmatpush1.bf16.msra.mxu0 %v1056
        %1123 = vmatprep.subr.bf16.mxu0 0
        %1124 = vmatpush1.bf16.msra.mxu0 %v1076
        %1125 = vmatprep.subr.bf16.mxu0 0
        %1126 = vmatpush1.bf16.msra.mxu0 0
        %1127 = vmatprep.subr.bf16.mxu0 0
        %1128 = vmatpush1.bf16.msra.mxu0 0
        %1129 = vmatprep.subr.bf16.mxu0 0
        %1130 = vmatpush1.bf16.msra.mxu0 0
        %1131 = vmatprep.subr.bf16.mxu0 0
        %1132 = vmatpush1.bf16.msra.mxu0 0
        %1133 = vmatprep.subr.bf16.mxu0 0
        %1134 = vmatpush1.bf16.msra.mxu0 0
        %1135 = vmatprep.subr.bf16.mxu0 0
        %1136 = vmatpush1.bf16.msra.mxu0 0
        %1137 = vmatprep.subr.bf16.mxu0 0
        %1138 = vmatpush1.bf16.msra.mxu0 0
        %1139 = vmatprep.subr.bf16.mxu0 0
        %1140 = vmatpush1.bf16.msra.mxu0 0
        %1141 = vmatprep.subr.bf16.mxu0 0
        %1142 = vmatpush1.bf16.msra.mxu0 0
        %1143 = vmatprep.subr.bf16.mxu0 0
        %1144 = vmatpush1.bf16.msra.mxu0 0
        %1145 = vmatprep.subr.bf16.mxu0 0
        %1146 = vmatpush1.bf16.msra.mxu0 0
        %1147 = vmatprep.subr.bf16.mxu0 0
        %1148 = vmatpush1.bf16.msra.mxu0 0
        %1149 = vmatprep.subr.bf16.mxu0 0
        %1150 = vmatpush1.bf16.msra.mxu0 0
        %1151 = vmatprep.mubr.bf16.mxu0 0
        %1152 = vmatmul.mubr.bf16.gmra.mrb[0].mxu0 %v1067
        %v1153 = vpop.f32.mrb[0].mxu0
        %v1154 = vadd.f32 %v1024, %v1153
        %v1155 = vpop.f32.mrb[0].mxu0
        %v1156 = vpop.f32.mrb[0].mxu0
        %v1157 = vpop.f32.mrb[0].mxu0
        %1158 = vdwg.mxu0
        %v1159 = vunpack.c.l.bf16 %v275
        %v1160 = vunpack.c.h.bf16 %v275
        %v1162 = vcombine.high %v1159, %v1159
        %v1164 = vadd.f32 %v1113, %v1159
        %v1165 = vadd.f32 %v1115, %v1162
        %v1166 = vadd.f32 %v1154, %v1160
        %v1167 = vmax.f32 %v1164, 0.0
        %v1168 = vmax.f32 %v1165, 0.0
        %v1169 = vmax.f32 %v1166, 0.0
        %v1170 = vpack.c.bf16 %v1167, %v1167
        %v1171 = vpack.c.bf16 %v1168, %v1168
        %v1172 = vpack.c.bf16 %v1169, %v1169
        %v1176 = vcombine.low %v1170, %v1171
        %v1178 = vunpack.c.l.s4 1983009808
        %v1179 = vunpack.c.0.s8 %v1178
        %v1180 = vlaneseq
        %v1181 = vshrl.u32 %v1180, 7
        %v1182 = vsub.s32 %v1179, %v1181
        %v1183 = vrot.slane %v1176, %v1182
        %v1185 = vunpack.c.l.s4 1983009808
        %v1186 = vunpack.c.0.s8 %v1185
        %v1187 = vlaneseq
        %v1188 = vshrl.u32 %v1187, 7
        %v1189 = vsub.s32 %v1186, %v1188
        %v1190 = vrot.slane %v1172, %v1189
        %v1191 = vcombine.low %v1183, %v1190
        %vm1193 = vmor %vm284, %vm615
        %vm1194 = vcmask 259076
        %vm1195 = vmor %vm1194, %vm1193
        %1196 = vst.msk [vmem:[%s267] sm:$0x3f] %vm1195, %v1191
        %s1197 = sand.u32 %s162, 1
        %s1198 = scalar_lea.sflag [#allocation7], %s1197
        %s1199 = sand.u32 %s162, 1
        %s1200 = smul.addr %s1199, 6
        %s1201 = scalar_lea.vmem [#allocation8], %s1200
        // Predicated region
        $region49: #{tpu_custom_call.1} parent=43 // pred_check
          %p1202 = pneg %p172
        $region50: #{tpu_custom_call.1} parent=43 // pred_check_branch
          %1204 = sbr.rel (%p1202) target = $region52
        $region51: #{tpu_custom_call.1} parent=43 // pred_region
          %s1206 = ssub.s32 96, 96
          %1207 = vsyncadd %s1198, %s1206
          %s1208 = smul.addr %s23, 3
          %s1209 = smul.addr %s1208, 32
          %s1210 = scalar_lea.hbm %s6, %s1209
          %s1212 = sshll.u32 %s1201, 4
          %s1213 = int_to_ptr.vmem [resolvable:$true] %s1212
          %1215 = dma.vmem_to_hbm [thread:$0]  %s1213, 96, %s1210, %s1198
        $region52: #{tpu_custom_call.1} parent=43 // pred_fallthru
          _
      $region44: #{tpu_custom_call.1} parent=5 // pred_fallthru
        _
      %p1216 = scmp.le.s32.totalorder 2, %s18
      // Predicated region
      $region53: #{tpu_custom_call.1} parent=5 // pred_check
        %p1217 = pneg %p1216
      $region54: #{tpu_custom_call.1} parent=5 // pred_check_branch
        %1219 = sbr.rel (%p1217) target = $region56
      $region55: #{tpu_custom_call.1} parent=5 // pred_region
        %s1220 = ssub.s32 %s18, 2
        // Predicated region
        $region57: #{tpu_custom_call.1} parent=55 // pred_check
          %p1221 = pneg %p178
        $region58: #{tpu_custom_call.1} parent=55 // pred_check_branch
          %1223 = sbr.rel (%p1221) target = $region60
        $region59: #{tpu_custom_call.1} parent=55 // pred_region
          %s1224 = sand.u32 %s163, 1
          %s1225 = scalar_lea.sflag [#allocation7], %s1224
          %s1226 = sand.u32 %s163, 1
          %s1227 = smul.addr %s1226, 6
          %s1228 = scalar_lea.vmem [#allocation8], %s1227
          %1229 = dma.done %s1225, 96
        $region60: #{tpu_custom_call.1} parent=55 // pred_fallthru
          _
      $region56: #{tpu_custom_call.1} parent=5 // pred_fallthru
        _
    $region6: #{tpu_custom_call.1} parent=1 // loop_footer
      %s22 = sadd.s32 1, %s18
    $region7: #{tpu_custom_call.1} parent=1 // loop_footer_branch
      %17 = sbr.rel target = $region3
    $region8: #{tpu_custom_call.1} parent=1 // loop_exit
      _
    %1230 = vsyncpa [#allocation6], 1
    %s1231 = scalar_lea.sflag [#allocation6], 1
    %1232 = vsyncpa %s1231, 1
    %1233 = vsyncpa [#allocation7], 1
    %s1234 = scalar_lea.sflag [#allocation7], 1
    %1235 = vsyncpa %s1234, 1

</llo_original>
